<compile_context>
chip_gen: v7x
topology: tpu7x:2x2x1
jax: 0.10.0
libtpu: 0.0.40
codegen_flags: <defaults>
</compile_context>

<pallas_src>
from functools import partial

import jax
import jax.numpy as jnp
from jax import lax
from jax.experimental import pallas as pl
from jax.experimental.pallas import tpu as pltpu


def _round_up(v, m):
    return ((v + m - 1) // m) * m


def _cdiv(a, b):
    return (a + b - 1) // b


# Contract the last dim of x (tm, K) with the last dim of w (tn, K) -> (tm, tn).
# This is x @ w.T expressed so the weight never needs a wrapper-side transpose.
_DOT_DIMS = (((1,), (1,)), ((), ()))


def _embed_matmul_2d(x2d, weight, *, compute_dtype=None, out_dtype=None,
                     tm_max=512, tn_max=512, tk_max=512):
    """y = x2d @ weight.T with weight in native (N, K) PyTorch layout."""
    M, K = x2d.shape
    N, K2 = weight.shape
    assert K == K2, (x2d.shape, weight.shape)
    out_dtype = x2d.dtype if out_dtype is None else out_dtype

    # ---- Tile selection -----------------------------------------------------
    # Output tile: lane-dense multiple of 128 -> unmasked vector stores except
    # (at most) the last ragged N tile.  No over-rounding of N.
    tn = min(tn_max, _round_up(N, 128))
    grid_n = _cdiv(N, tn)

    # Row tile: as large as possible (amortize ~0.35us per grid step), but when
    # N gives a single tile make sure M provides >=2 tiles so both v7x
    # TensorCores get work under the "parallel" dimension semantics.
    tm = min(tm_max, _round_up(M, 8))
    if grid_n == 1 and _cdiv(M, tm) == 1 and M > 8:
        tm = _round_up(_cdiv(M, 2), 8)
    grid_m = _cdiv(M, tm)

    compiler_params_2d = pltpu.CompilerParams(
        dimension_semantics=("parallel", "parallel"),
        vmem_limit_bytes=32 * 1024 * 1024,
    )
    compiler_params_3d = pltpu.CompilerParams(
        dimension_semantics=("parallel", "parallel", "arbitrary"),
        vmem_limit_bytes=32 * 1024 * 1024,
    )

    if K <= tk_max:
        # ---- Fast path: the whole contraction fits in one tile -------------
        # No accumulator scratch, no pl.when, no zero-init: one dot + one store
        # per output tile.  The kernel block shapes use the full K dim, so no
        # padding of x or weight is needed at all.
        def kernel(x_ref, w_ref, o_ref):
            x = x_ref[...]
            w = w_ref[...]
            if compute_dtype is not None:
                x = x.astype(compute_dtype)
                w = w.astype(compute_dtype)
            o_ref[...] = lax.dot_general(
                x, w, _DOT_DIMS, preferred_element_type=jnp.float32
            ).astype(o_ref.dtype)

        return pl.pallas_call(
            kernel,
            out_shape=jax.ShapeDtypeStruct((M, N), out_dtype),
            grid_spec=pltpu.PrefetchScalarGridSpec(
                num_scalar_prefetch=0,
                grid=(grid_m, grid_n),
                in_specs=[
                    pl.BlockSpec((tm, K), lambda i, j: (i, 0)),
                    # Weight in native (N, K) layout; with one N tile its block
                    # index is constant -> DMA'd once, stays resident in VMEM.
                    pl.BlockSpec((tn, K), lambda i, j: (j, 0)),
                ],
                out_specs=pl.BlockSpec((tm, tn), lambda i, j: (i, j)),
            ),
            compiler_params=compiler_params_2d,
        )(x2d, weight)

    # ---- General path: K is tiled with an f32 VMEM accumulator -------------
    tk = tk_max
    Kp = _round_up(K, tk)
    if Kp != K:
        # Zero padding of the K remainder is required for correctness (padded
        # K contributes exactly 0 to every output element).
        x2d = jnp.pad(x2d, ((0, 0), (0, Kp - K)))
        weight = jnp.pad(weight, ((0, 0), (0, Kp - K)))
    grid_k = Kp // tk

    def kernel(x_ref, w_ref, o_ref, acc_ref):
        k = pl.program_id(2)
        x = x_ref[...]
        w = w_ref[...]
        if compute_dtype is not None:
            x = x.astype(compute_dtype)
            w = w.astype(compute_dtype)
        contrib = lax.dot_general(
            x, w, _DOT_DIMS, preferred_element_type=jnp.float32
        )

        @pl.when(k == 0)
        def _():
            acc_ref[...] = contrib          # first-iteration assign: no zeros write

        @pl.when(k > 0)
        def _():
            acc_ref[...] += contrib

        @pl.when(k == pl.num_programs(2) - 1)
        def _():
            o_ref[...] = acc_ref[...].astype(o_ref.dtype)

    return pl.pallas_call(
        kernel,
        out_shape=jax.ShapeDtypeStruct((M, N), out_dtype),
        grid_spec=pltpu.PrefetchScalarGridSpec(
            num_scalar_prefetch=0,
            grid=(grid_m, grid_n, grid_k),
            in_specs=[
                pl.BlockSpec((tm, tk), lambda i, j, k: (i, k)),
                pl.BlockSpec((tn, tk), lambda i, j, k: (j, k)),
            ],
            out_specs=pl.BlockSpec((tm, tn), lambda i, j, k: (i, j)),
            scratch_shapes=[pltpu.VMEM((tm, tn), jnp.float32)],
        ),
        compiler_params=compiler_params_3d,
    )(x2d, weight)


@partial(jax.jit, static_argnames=("compute_dtype", "out_dtype"))
def embedding_forward(x, weight, compute_dtype=None, out_dtype=None):
    """EmbeddingNet.forward: h_em = x @ weight.T  (nn.Linear, bias=False).

    x: [..., node_dim]; weight: [embedding_dim, node_dim] (PyTorch layout).
    compute_dtype: optionally cast x/w tiles in-kernel (e.g. jnp.bfloat16) for
      ~3x MXU throughput; accumulation stays f32. Default None = exact f32 path.
    out_dtype: optionally emit e.g. bf16 activations to halve output writeback.
    Returns: [..., embedding_dim].
    """
    *lead, K = x.shape
    N = weight.shape[0]
    x2d = x.reshape(-1, K)
    y2d = _embed_matmul_2d(
        x2d, weight, compute_dtype=compute_dtype, out_dtype=out_dtype
    )
    return y2d.reshape(*lead, N)


def init_embedding_params(key, node_dim, embedding_dim, dtype=jnp.float32):
    """Matches torch.nn.Linear default init (uniform +-1/sqrt(in_features))."""
    bound = 1.0 / (node_dim ** 0.5)
    # PyTorch stores weight as (out_features, in_features).
    weight = jax.random.uniform(
        key, (embedding_dim, node_dim), dtype, -bound, bound
    )
    return weight


if __name__ == "__main__":
    key = jax.random.PRNGKey(0)
    k_x, k_w = jax.random.split(key)

    # Typical EmbeddingNet use in graph_layers: x is [batch, graph_size, node_dim].
    batch, graph_size, node_dim, embedding_dim = 2, 8, 2, 128
    x = jax.random.normal(k_x, (batch, graph_size, node_dim), jnp.float32)
    weight = init_embedding_params(k_w, node_dim, embedding_dim)

    # Exact f32 path (matches PyTorch nn.Linear semantics).
    out = embedding_forward(x, weight)
    jax.block_until_ready(out)

    ref = x @ weight.T
    assert out.shape == (batch, graph_size, embedding_dim)
    assert jnp.allclose(out, ref, atol=1e-5, rtol=1e-5)

    # Also exercise the in-kernel bf16 compute path (looser tolerance).
    out_bf16 = embedding_forward(x, weight, compute_dtype=jnp.bfloat16)
    jax.block_until_ready(out_bf16)
    assert jnp.allclose(out_bf16.astype(jnp.float32), ref, atol=5e-2, rtol=5e-2)

    print("KERNEL_OK")
</pallas_src>

<mosaic_0001>
module attributes {stable_mosaic.version = 11 : i64} {
  func.func @kernel(%arg0: i32, %arg1: i32, %arg2: memref<8x2xf32, #tpu.memory_space<vmem>>, %arg3: memref<128x2xf32, #tpu.memory_space<vmem>>, %arg4: memref<8x128xf32, #tpu.memory_space<vmem>>) attributes {dimension_semantics = [#tpu.dimension_semantics<parallel>, #tpu.dimension_semantics<parallel>], iteration_bounds = array<i64: 2, 1>, scalar_prefetch = 0 : i64, scratch_operands = 0 : i64, tpu.core_type = #tpu.core_type<tc>, window_params = [{transform_indices = @transform_0, window_bounds = array<i64: 8, 2>}, {transform_indices = @transform_1, window_bounds = array<i64: 128, 2>}, {transform_indices = @transform_2, window_bounds = array<i64: 8, 128>}]} {
    %c0 = arith.constant 0 : index
    %c0_0 = arith.constant 0 : index
    %0 = vector.load %arg2[%c0, %c0_0] : memref<8x2xf32, #tpu.memory_space<vmem>>, vector<8x2xf32>
    %c0_1 = arith.constant 0 : index
    %c0_2 = arith.constant 0 : index
    %1 = vector.load %arg3[%c0_1, %c0_2] : memref<128x2xf32, #tpu.memory_space<vmem>>, vector<128x2xf32>
    %cst = arith.constant dense<0.000000e+00> : vector<8x128xf32>
    %2 = tpu.matmul %0, %1, %cst {dimension_numbers = #tpu.dot_dimension_numbers<[1], [1], [0], [0], [0, 0, 1, 0], [], []>} : vector<8x2xf32>, vector<128x2xf32>, vector<8x128xf32> -> vector<8x128xf32>
    %c0_3 = arith.constant 0 : index
    %c0_4 = arith.constant 0 : index
    %3 = vector.load %arg4[%c0_3, %c0_4] : memref<8x128xf32, #tpu.memory_space<vmem>>, vector<8x128xf32>
    tpu.vector_store %arg4[%c0_3, %c0_4], %2 {strides = array<i32>} : memref<8x128xf32, #tpu.memory_space<vmem>>, vector<8x128xf32>,
    return
  }
  func.func @transform_0(%arg0: i32, %arg1: i32) -> (i32, i32) {
    %c0_i32 = arith.constant 0 : i32
    %c0_i32_0 = arith.constant 0 : i32
    return %arg0, %c0_i32 : i32, i32
  }
  func.func @transform_1(%arg0: i32, %arg1: i32) -> (i32, i32) {
    %c0_i32 = arith.constant 0 : i32
    %c0_i32_0 = arith.constant 0 : i32
    return %arg1, %c0_i32 : i32, i32
  }
  func.func @transform_2(%arg0: i32, %arg1: i32) -> (i32, i32) {
    %c0_i32 = arith.constant 0 : i32
    return %arg0, %arg1 : i32, i32
  }
}

</mosaic_0001>

<llo_original>
// kernel: embedding_forward.1
$region0: #{embedding_forward.1}
  #allocation0 [shape = 'u32[]', space=smem, size = 0x4, offset = 0x4, fixed_abs, tag = 'smem constant byte address 0x4 - core index']
  #allocation1 [shape = 'u32[144,128]{1,0:T(1,128)}', space=vmem, size = 0x12000, scoped, tag = 'internal scratch']
  %s0 = inlined_call_operand.vmem [shape: f32[16,2], index: 0, kind: input, shape index: {}]
  %s1 = inlined_call_operand.vmem [shape: f32[128,2], index: 1, kind: input, shape index: {}]
  %s2 = inlined_call_operand.hbm [shape: f32[16,128], index: 2, kind: output, shape index: {}]
  %s3 = sld [smem:[#allocation0]]
  $region41: #{embedding_forward.1} parent=0
    _
  %s5 = ssub.s32 1, %s3
  %s6 = scalar_select 0, %s5, %s3
  $region1: #{embedding_forward.1} parent=0
    #allocation2 [shape = 'u8[8192]{0}', space=vmem, size = 0x2000, scoped, tag = 'output window, operand 0']
    #allocation3 [shape = 's32[2]{0}', space=sflag, size = 0x8, scoped, tag = 'scoped memory for embedding_forward.1']
    %7 = vsyncpa [#allocation3], 0
    %s8 = scalar_lea.sflag [#allocation3], 1
    %9 = vsyncpa %s8, 0
    loop: start=0, step=1, limit=4
    $region2: #{embedding_forward.1} parent=1 // loop_pre_header
      _
    $region3: #{embedding_forward.1} parent=1 // loop_header
      %s11 = sphi 0, %s15
      %p12 = scmp.ge.s32.totalorder %s11, 4
      %s18 = sphi 0, %s30
      %s19 = sphi 0, %s26
      %s20 = sphi 0, %s18
      %s21 = sphi 0, %s19
      %s22 = sphi 0, %s20
      %s23 = sphi 0, %s21
      %s33 = sphi 0, %s35
      %s36 = sphi 0, %s33
      %s37 = sphi 0, %s36
      %s53 = sphi 0, %s37
      %s59 = sphi 0, %s61
      %s62 = sphi 0, %s59
      %s63 = sphi 0, %s62
      %s79 = sphi 0, %s63
      %s87 = sphi 0, %s89
      %s90 = sphi 0, %s87
      %s91 = sphi 0, %s90
      %s107 = sphi 0, %s91
    $region4: #{embedding_forward.1} parent=1 // loop_header_branch
      %14 = sbr.rel (%p12) target = $region8
    $region5: #{embedding_forward.1} parent=1 // loop_body
      %s16 = ssub.s32 %s11, 1
      %s17 = ssub.s32 %s11, 2
      %s24 = sadd.s32 1, %s19
      %p25 = scmp.ge.s32.totalorder %s24, 1
      %s26 = scalar_select %p25, 0, %s24
      %s27 = sadd.s32 1, %s18
      %s28 = scalar_select %p25, %s27, %s18
      %p29 = scmp.ge.s32.totalorder %s28, 2
      %s30 = scalar_select %p29, 0, %s28
      %s31 = ssub.s32 %s18, %s30
      %p32 = scmp.eq.s32.totalorder %s31, 0
      %s34 = sadd.s32 %s33, 1
      %s35 = scalar_select %p32, %s33, %s34
      %p38 = pneg %p32
      %p39 = scmp.eq.s32.totalorder %s11, 1
      %p40 = por %p38, %p39
      %p41 = scmp.ne.s32.totalorder %s33, %s36
      %p42 = scmp.eq.s32.totalorder %s11, 0
      %p43 = por %p41, %p42
      %p44 = scmp.ne.s32.totalorder %s33, %s36
      %p45 = scmp.eq.s32.totalorder %s16, 1
      %p46 = por %p44, %p45
      %p47 = scmp.ne.s32.totalorder %s36, %s37
      %p48 = scmp.eq.s32.totalorder %s16, 0
      %p49 = por %p47, %p48
      %p50 = scmp.ne.s32.totalorder %s36, %s37
      %p51 = scmp.eq.s32.totalorder %s17, 1
      %p52 = por %p50, %p51
      %p54 = scmp.ne.s32.totalorder %s37, %s53
      %p55 = scmp.eq.s32.totalorder %s17, 0
      %p56 = por %p54, %p55
      %s57 = ssub.s32 %s19, %s26
      %p58 = scmp.eq.s32.totalorder %s57, 0
      %s60 = sadd.s32 %s59, 1
      %s61 = scalar_select %p58, %s59, %s60
      %p64 = pneg %p58
      %p65 = scmp.eq.s32.totalorder %s11, 1
      %p66 = por %p64, %p65
      %p67 = scmp.ne.s32.totalorder %s59, %s62
      %p68 = scmp.eq.s32.totalorder %s11, 0
      %p69 = por %p67, %p68
      %p70 = scmp.ne.s32.totalorder %s59, %s62
      %p71 = scmp.eq.s32.totalorder %s16, 1
      %p72 = por %p70, %p71
      %p73 = scmp.ne.s32.totalorder %s62, %s63
      %p74 = scmp.eq.s32.totalorder %s16, 0
      %p75 = por %p73, %p74
      %p76 = scmp.ne.s32.totalorder %s62, %s63
      %p77 = scmp.eq.s32.totalorder %s17, 1
      %p78 = por %p76, %p77
      %p80 = scmp.ne.s32.totalorder %s63, %s79
      %p81 = scmp.eq.s32.totalorder %s17, 0
      %p82 = por %p80, %p81
      %s83 = ssub.s32 %s18, %s30
      %s84 = ssub.s32 %s19, %s26
      %s85 = sor.u32 %s83, %s84
      %p86 = scmp.eq.s32.totalorder %s85, 0
      %s88 = sadd.s32 %s87, 1
      %s89 = scalar_select %p86, %s87, %s88
      %p92 = pneg %p86
      %p93 = scmp.eq.s32.totalorder %s11, 1
      %p94 = por %p92, %p93
      %p95 = scmp.ne.s32.totalorder %s87, %s90
      %p96 = scmp.eq.s32.totalorder %s11, 0
      %p97 = por %p95, %p96
      %p98 = scmp.ne.s32.totalorder %s87, %s90
      %p99 = scmp.eq.s32.totalorder %s16, 1
      %p100 = por %p98, %p99
      %p101 = scmp.ne.s32.totalorder %s90, %s91
      %p102 = scmp.eq.s32.totalorder %s16, 0
      %p103 = por %p101, %p102
      %p104 = scmp.ne.s32.totalorder %s90, %s91
      %p105 = scmp.eq.s32.totalorder %s17, 1
      %p106 = por %p104, %p105
      %p108 = scmp.ne.s32.totalorder %s91, %s107
      %p109 = scmp.eq.s32.totalorder %s17, 0
      %p110 = por %p108, %p109
      %p111 = scmp.le.s32.totalorder 1, %s11
      %p112 = scmp.lt.s32.totalorder %s11, 3
      %p113 = pnand %p111, %p112
      %p114 = pneg %p113
      // Predicated region
      $region9: #{embedding_forward.1} parent=5 // pred_check
        _
      $region10: #{embedding_forward.1} parent=5 // pred_check_branch
        %116 = sbr.rel (%p113) target = $region12
      $region11: #{embedding_forward.1} parent=5 // pred_region
        %s117 = ssub.s32 %s11, 1
        // Predicated region
        $region13: #{embedding_forward.1} parent=11 // pred_check
          %p118 = pneg %p75
        $region14: #{embedding_forward.1} parent=11 // pred_check_branch
          %120 = sbr.rel (%p118) target = $region16
        $region15: #{embedding_forward.1} parent=11 // pred_region
          %s121 = smul.u32 16, %s21
          %p122 = scmp.lt.s32.totalorder %s121, 15
          %s123 = scalar_select %p122, %s121, 15
          %s124 = smul.addr %s123, 8
          %s125 = scalar_lea.vmem %s1, %s124
          %s126 = smul.u32 16, %s21
        $region16: #{embedding_forward.1} parent=11 // pred_fallthru
          _
      $region12: #{embedding_forward.1} parent=5 // pred_fallthru
        _
      %p127 = scmp.lt.s32.totalorder %s11, 2
      // Predicated region
      $region17: #{embedding_forward.1} parent=5 // pred_check
        %p128 = pneg %p127
      $region18: #{embedding_forward.1} parent=5 // pred_check_branch
        %130 = sbr.rel (%p128) target = $region20
      $region19: #{embedding_forward.1} parent=5 // pred_region
        // Predicated region
        $region21: #{embedding_forward.1} parent=19 // pred_check
          %p131 = pneg %p43
        $region22: #{embedding_forward.1} parent=19 // pred_check_branch
          %133 = sbr.rel (%p131) target = $region24
        $region23: #{embedding_forward.1} parent=19 // pred_region
          %p134 = scmp.lt.s32.totalorder %s18, 1
          %s135 = scalar_select %p134, %s18, 1
          %s136 = smul.addr %s135, 8
          %s137 = scalar_lea.vmem %s0, %s136
        $region24: #{embedding_forward.1} parent=19 // pred_fallthru
          _
      $region20: #{embedding_forward.1} parent=5 // pred_fallthru
        _
      %p138 = scmp.le.s32.totalorder 1, %s11
      %p139 = scmp.lt.s32.totalorder %s11, 3
      %p140 = pnand %p138, %p139
      %p141 = pneg %p140
      // Predicated region
      $region25: #{embedding_forward.1} parent=5 // pred_check
        _
      $region26: #{embedding_forward.1} parent=5 // pred_check_branch
        %143 = sbr.rel (%p140) target = $region28
      $region27: #{embedding_forward.1} parent=5 // pred_region
        %s144 = ssub.s32 %s11, 1
        %p145 = scmp.lt.s32.totalorder %s20, 1
        %s146 = scalar_select %p145, %s20, 1
        %s147 = smul.addr %s146, 8
        %s148 = scalar_lea.vmem %s0, %s147
        %p149 = pneg %p49
        %p150 = pneg %p46
        %s151 = smul.u32 16, %s21
        %p152 = scmp.lt.s32.totalorder %s151, 15
        %s153 = scalar_select %p152, %s151, 15
        %s154 = smul.addr %s153, 8
        %s155 = scalar_lea.vmem %s1, %s154
        %p156 = pneg %p75
        %p157 = pneg %p72
        %p158 = pneg %p103
        %p159 = pneg %p100
        %s160 = sand.u32 %s90, 1
        %s161 = scalar_lea.sflag [#allocation3], %s160
        %s162 = sand.u32 %s90, 1
        %s163 = smul.addr %s162, 8
        %s164 = scalar_lea.vmem [#allocation2], %s163
        %p165 = scmp.lt.s32.totalorder %s20, 1
        %s166 = scalar_select %p165, %s20, 1
        %s167 = smul.addr %s166, 8
        %s168 = scalar_lea.vmem %s0, %s167
        %s169 = smul.u32 16, %s21
        %p170 = scmp.lt.s32.totalorder %s169, 15
        %s171 = scalar_select %p170, %s169, 15
        %s172 = smul.addr %s171, 8
        %s173 = scalar_lea.vmem %s1, %s172
        %s174 = smul.u32 16, %s21
        %v175 = vld [vmem:[%s168] sm:$0xff]
        %v176 = vld [vmem:[%s173] sm:$0xff]
        %v177 = vld [vmem:[%s173 + $0x8] sm:$0xff]
        %v178 = vld [vmem:[%s173 + $0x10] sm:$0xff]
        %v179 = vld [vmem:[%s173 + $0x18] sm:$0xff]
        %v180 = vld [vmem:[%s173 + $0x20] sm:$0xff]
        %v181 = vld [vmem:[%s173 + $0x28] sm:$0xff]
        %v182 = vld [vmem:[%s173 + $0x30] sm:$0xff]
        %v183 = vld [vmem:[%s173 + $0x38] sm:$0xff]
        %v184 = vld [vmem:[%s173 + $0x40] sm:$0xff]
        %v185 = vld [vmem:[%s173 + $0x48] sm:$0xff]
        %v186 = vld [vmem:[%s173 + $0x50] sm:$0xff]
        %v187 = vld [vmem:[%s173 + $0x58] sm:$0xff]
        %v188 = vld [vmem:[%s173 + $0x60] sm:$0xff]
        %v189 = vld [vmem:[%s173 + $0x68] sm:$0xff]
        %v190 = vld [vmem:[%s173 + $0x70] sm:$0xff]
        %v191 = vld [vmem:[%s173 + $0x78] sm:$0xff]
        %vm192 = vcmask 15360
        %v194 = vsel %vm192, %v175, 0
        %v197 = vsel %vm192, %v176, 0
        %v200 = vsel %vm192, %v177, 0
        %v203 = vsel %vm192, %v178, 0
        %v206 = vsel %vm192, %v179, 0
        %v209 = vsel %vm192, %v180, 0
        %v212 = vsel %vm192, %v181, 0
        %v215 = vsel %vm192, %v182, 0
        %v218 = vsel %vm192, %v183, 0
        %v221 = vsel %vm192, %v184, 0
        %v224 = vsel %vm192, %v185, 0
        %v227 = vsel %vm192, %v186, 0
        %v230 = vsel %vm192, %v187, 0
        %v233 = vsel %vm192, %v188, 0
        %v236 = vsel %vm192, %v189, 0
        %v239 = vsel %vm192, %v190, 0
        %v242 = vsel %vm192, %v191, 0
        %244 = vmatprep.subr.mxu0 0.0
        %245 = vmatpush1.xpose.msra.mxu0 %v197
        %246 = vmatprep.subr.mxu0 0.0
        %247 = vmatpush1.xpose.msra.mxu0 %v200
        %248 = vmatprep.subr.mxu0 0.0
        %249 = vmatpush1.xpose.msra.mxu0 %v203
        %250 = vmatprep.subr.mxu0 0.0
        %251 = vmatpush1.xpose.msra.mxu0 %v206
        %252 = vmatprep.subr.mxu0 0.0
        %253 = vmatpush1.xpose.msra.mxu0 %v209
        %254 = vmatprep.subr.mxu0 0.0
        %255 = vmatpush1.xpose.msra.mxu0 %v212
        %256 = vmatprep.subr.mxu0 0.0
        %257 = vmatpush1.xpose.msra.mxu0 %v215
        %258 = vmatprep.subr.mxu0 0.0
        %259 = vmatpush1.xpose.msra.mxu0 %v218
        %260 = vmatprep.subr.mxu0 0.0
        %261 = vmatpush1.xpose.msra.mxu0 %v221
        %262 = vmatprep.subr.mxu0 0.0
        %263 = vmatpush1.xpose.msra.mxu0 %v224
        %264 = vmatprep.subr.mxu0 0.0
        %265 = vmatpush1.xpose.msra.mxu0 %v227
        %266 = vmatprep.subr.mxu0 0.0
        %267 = vmatpush1.xpose.msra.mxu0 %v230
        %268 = vmatprep.subr.mxu0 0.0
        %269 = vmatpush1.xpose.msra.mxu0 %v233
        %270 = vmatprep.subr.mxu0 0.0
        %271 = vmatpush1.xpose.msra.mxu0 %v236
        %272 = vmatprep.subr.mxu0 0.0
        %273 = vmatpush1.xpose.msra.mxu0 %v239
        %274 = vmatprep.subr.mxu0 0.0
        %275 = vmatpush1.xpose.msra.mxu0 %v242
        %276 = vmatprep.subr.mxu0 0.0
        %277 = vmatpush1.xpose.msra.mxu0 0.0
        %278 = vmatprep.subr.mxu0 0.0
        %279 = vmatpush1.xpose.msra.mxu0 0.0
        %280 = vmatprep.subr.mxu0 0.0
        %281 = vmatpush1.xpose.msra.mxu0 0.0
        %282 = vmatprep.subr.mxu0 0.0
        %283 = vmatpush1.xpose.msra.mxu0 0.0
        %284 = vmatprep.subr.mxu0 0.0
        %285 = vmatpush1.xpose.msra.mxu0 0.0
        %286 = vmatprep.subr.mxu0 0.0
        %287 = vmatpush1.xpose.msra.mxu0 0.0
        %288 = vmatprep.subr.mxu0 0.0
        %289 = vmatpush1.xpose.msra.mxu0 0.0
        %290 = vmatprep.subr.mxu0 0.0
        %291 = vmatpush1.xpose.msra.mxu0 0.0
        %292 = vmatprep.subr.mxu0 0.0
        %293 = vmatpush1.xpose.msra.mxu0 0.0
        %294 = vmatprep.subr.mxu0 0.0
        %295 = vmatpush1.xpose.msra.mxu0 0.0
        %296 = vmatprep.subr.mxu0 0.0
        %297 = vmatpush1.xpose.msra.mxu0 0.0
        %298 = vmatprep.subr.mxu0 0.0
        %299 = vmatpush1.xpose.msra.mxu0 0.0
        %300 = vmatprep.subr.mxu0 0.0
        %301 = vmatpush1.xpose.msra.mxu0 0.0
        %302 = vmatprep.subr.mxu0 0.0
        %303 = vmatpush1.xpose.msra.mxu0 0.0
        %304 = vmatprep.subr.mxu0 0.0
        %305 = vmatpush1.xpose.msra.mxu0 0.0
        %306 = vmatprep.subr.mxu0 0.0
        %307 = vmatpush1.xpose.msra.mxu0 0.0
        %308 = vmatprep.mubr.f32.mxu0 0.0
        %309 = vmatmul.mubr.f32.gmra.mrb[0].mxu0 %v194
        %v310 = vpop.f32.mrb[0].mxu0
        %v311 = vadd.f32 0.0, %v310
        %v312 = vpop.f32.mrb[0].mxu0
        %313 = vdwg.mxu0
        %314 = vst [vmem:[%s164] sm:$0xff] %v311
        %s315 = sand.u32 %s90, 1
        %s316 = scalar_lea.sflag [#allocation3], %s315
        %s317 = sand.u32 %s90, 1
        %s318 = smul.addr %s317, 8
        %s319 = scalar_lea.vmem [#allocation2], %s318
        // Predicated region
        $region29: #{embedding_forward.1} parent=27 // pred_check
          %p320 = pneg %p100
        $region30: #{embedding_forward.1} parent=27 // pred_check_branch
          %322 = sbr.rel (%p320) target = $region32
        $region31: #{embedding_forward.1} parent=27 // pred_region
          %s324 = ssub.s32 128, 128
          %325 = vsyncadd %s316, %s324
          %s326 = sadd.s32 %s21, %s20
          %s327 = smul.addr %s326, 128
          %s328 = scalar_lea.hbm %s2, %s327
          %s330 = sshll.u32 %s319, 4
          %s331 = int_to_ptr.vmem [resolvable:$true] %s330
          %333 = dma.vmem_to_hbm [thread:$0]  %s331, 128, %s328, %s316
        $region32: #{embedding_forward.1} parent=27 // pred_fallthru
          _
      $region28: #{embedding_forward.1} parent=5 // pred_fallthru
        _
      %p334 = scmp.le.s32.totalorder 2, %s11
      // Predicated region
      $region33: #{embedding_forward.1} parent=5 // pred_check
        %p335 = pneg %p334
      $region34: #{embedding_forward.1} parent=5 // pred_check_branch
        %337 = sbr.rel (%p335) target = $region36
      $region35: #{embedding_forward.1} parent=5 // pred_region
        %s338 = ssub.s32 %s11, 2
        // Predicated region
        $region37: #{embedding_forward.1} parent=35 // pred_check
          %p339 = pneg %p106
        $region38: #{embedding_forward.1} parent=35 // pred_check_branch
          %341 = sbr.rel (%p339) target = $region40
        $region39: #{embedding_forward.1} parent=35 // pred_region
          %s342 = sand.u32 %s91, 1
          %s343 = scalar_lea.sflag [#allocation3], %s342
          %s344 = sand.u32 %s91, 1
          %s345 = smul.addr %s344, 8
          %s346 = scalar_lea.vmem [#allocation2], %s345
          %347 = dma.done %s343, 128
        $region40: #{embedding_forward.1} parent=35 // pred_fallthru
          _
      $region36: #{embedding_forward.1} parent=5 // pred_fallthru
        _
    $region6: #{embedding_forward.1} parent=1 // loop_footer
      %s15 = sadd.s32 1, %s11
    $region7: #{embedding_forward.1} parent=1 // loop_footer_branch
      %10 = sbr.rel target = $region3
    $region8: #{embedding_forward.1} parent=1 // loop_exit
      _
    %348 = vsyncpa [#allocation3], 1
    %s349 = scalar_lea.sflag [#allocation3], 1
    %350 = vsyncpa %s349, 1

</llo_original>
